<compile_context>
chip_gen: v5e
topology: v5e:2x2
jax: 0.10.0
libtpu: 0.0.40
codegen_flags: <defaults>
</compile_context>

<pallas_src>
import jax
import jax.numpy as jnp
from jax.experimental import pallas as pl
from jax.experimental.pallas import tpu as pltpu

D_OBS = 28 * 28      # 784
D_LAT = 10
D_HID = 100

# padded sizes
PIN = 128            # padded fused-input features (z in cols 0:10, y in col 10)
PHID = 128           # per-branch padded hidden (100 -> 128)
PHID2 = 2 * PHID     # fused hidden: [z block | y block]
POUT = 896           # 784 -> 7*128 (lane-dense output)


def _p_kernel(x_ref, w_in_ref, w_mid_ref, w_out_ref, out_ref):
    # Fused block-diagonal MLP: relu(x@W_in) -> relu(.@W_mid) -> .@W_out
    # (the stacked W_out sums the z- and y-branch contributions).
    x = x_ref[...]                                                     # (PB, 128) bf16
    h1 = jnp.maximum(
        jnp.dot(x, w_in_ref[...], preferred_element_type=jnp.float32), 0.0)
    h2 = jnp.maximum(
        jnp.dot(h1.astype(jnp.bfloat16), w_mid_ref[...],
                preferred_element_type=jnp.float32), 0.0)
    out_ref[...] = jnp.dot(h2.astype(jnp.bfloat16), w_out_ref[...],
                           preferred_element_type=jnp.float32)          # (PB, 896) f32


def prepare_fused_weights(params):
    """Run ONCE at init: transpose (F.linear(x,W)==x@W.T), zero-pad, block-diagonal
    fuse the two MLPs, and cast to bf16."""
    w_in = jnp.zeros((PIN, PHID2), jnp.float32)
    w_in = w_in.at[:D_LAT, :D_HID].set(params["z_w_in"].T.astype(jnp.float32))
    w_in = w_in.at[D_LAT:D_LAT + 1, PHID:PHID + D_HID].set(
        params["y_w_in"].T.astype(jnp.float32))

    w_mid = jnp.zeros((PHID2, PHID2), jnp.float32)
    w_mid = w_mid.at[:D_HID, :D_HID].set(params["z_w_mid"].T.astype(jnp.float32))
    w_mid = w_mid.at[PHID:PHID + D_HID, PHID:PHID + D_HID].set(
        params["y_w_mid"].T.astype(jnp.float32))

    w_out = jnp.zeros((PHID2, POUT), jnp.float32)
    w_out = w_out.at[:D_HID, :D_OBS].set(params["z_w_out"].T.astype(jnp.float32))
    w_out = w_out.at[PHID:PHID + D_HID, :D_OBS].set(
        params["y_w_out"].T.astype(jnp.float32))

    return {
        "w_in": w_in.astype(jnp.bfloat16),
        "w_mid": w_mid.astype(jnp.bfloat16),
        "w_out": w_out.astype(jnp.bfloat16),
    }


@jax.jit
def p_obs_logits_pallas(z, y_float, fused):
    """z: (10,) or (K,10); y_float: scalar or (K,). Returns (784,) or (K,784) f32."""
    single = (z.ndim == 1)
    z2 = jnp.atleast_2d(z)                    # (K, 10)
    y2 = jnp.atleast_1d(y_float)              # (K,)
    k = z2.shape[0]
    pb = max(8, -(-k // 8) * 8)               # sublane-aligned batch

    # pack fused input: z in cols 0:10, y in col 10
    x = jnp.zeros((pb, PIN), jnp.float32)
    x = x.at[:k, :D_LAT].set(z2.astype(jnp.float32))
    x = x.at[:k, D_LAT].set(y2.astype(jnp.float32))
    x = x.astype(jnp.bfloat16)

    full = lambda shape: pl.BlockSpec(shape, lambda: tuple(0 for _ in shape))

    out = pl.pallas_call(
        _p_kernel,
        out_shape=jax.ShapeDtypeStruct((pb, POUT), jnp.float32),
        grid=(),
        in_specs=[
            full((pb, PIN)),
            full((PIN, PHID2)), full((PHID2, PHID2)), full((PHID2, POUT)),
        ],
        out_specs=full((pb, POUT)),
        compiler_params=pltpu.CompilerParams(vmem_limit_bytes=4 * 1024 * 1024),
    )(x, fused["w_in"], fused["w_mid"], fused["w_out"])

    res = out[:k, :D_OBS]
    return res[0] if single else res


def _mlp_ref(x, w_in, w_mid, w_out):
    x = jnp.maximum(x @ w_in.T, 0.0)
    x = jnp.maximum(x @ w_mid.T, 0.0)
    return x @ w_out.T


if __name__ == "__main__":
    key = jax.random.PRNGKey(0)
    ks = jax.random.split(key, 8)

    # deterministic parameter init (matches nn.Parameter(t.randn(...)/10) shapes)
    params = {
        "y_w_in":  jax.random.normal(ks[0], (D_HID, 1)) / 10.0,
        "y_w_mid": jax.random.normal(ks[1], (D_HID, D_HID)) / 10.0,
        "y_w_out": jax.random.normal(ks[2], (D_OBS, D_HID)) / 10.0,
        "z_w_in":  jax.random.normal(ks[3], (D_HID, D_LAT)) / 10.0,
        "z_w_mid": jax.random.normal(ks[4], (D_HID, D_HID)) / 10.0,
        "z_w_out": jax.random.normal(ks[5], (D_OBS, D_HID)) / 10.0,
    }
    prob = jnp.full((D_LAT,), 1.0 / D_LAT, jnp.float32)   # self.prob parameter

    # one-time weight preparation (cached across all forward calls)
    fused = jax.block_until_ready(prepare_fused_weights(params))

    # tr['y'] ~ Categorical(logits=prob)  (module passes probs as logits; uniform either way)
    # tr['z'] ~ Normal(ones(10), ones(10))
    y = jax.random.categorical(ks[6], prob)                      # scalar int
    z = jnp.ones((D_LAT,)) + jax.random.normal(ks[7], (D_LAT,))  # (10,)
    y_float = y.astype(jnp.float32)                              # y.unsqueeze(0).float()

    # TODO(synk): alan.Categorical / Normal / ContinuousBernoulli distribution-object
    # construction is probabilistic-programming glue with no kernel equivalent;
    # the kernel produces obs_logits (the module's compute).
    obs_logits = p_obs_logits_pallas(z, y_float, fused)
    obs_logits = jax.block_until_ready(obs_logits)

    # pure-JAX f32 reference (kernel uses bf16 weights/activations -> looser tolerance)
    ref = (_mlp_ref(z[None, :], params["z_w_in"], params["z_w_mid"], params["z_w_out"])[0]
           + _mlp_ref(y_float[None, None], params["y_w_in"], params["y_w_mid"], params["y_w_out"])[0])
    assert obs_logits.shape == (D_OBS,)
    max_err = jnp.max(jnp.abs(obs_logits - ref))
    assert jnp.allclose(obs_logits, ref, atol=5e-2, rtol=5e-2), f"mismatch vs reference: {max_err}"

    print("KERNEL_OK")
</pallas_src>

<mosaic_0001>
module attributes {stable_mosaic.version = 11 : i64} {
  func.func @_p_kernel(%arg0: memref<8x128xbf16, #tpu.memory_space<vmem>>, %arg1: memref<128x256xbf16, #tpu.memory_space<vmem>>, %arg2: memref<256x256xbf16, #tpu.memory_space<vmem>>, %arg3: memref<256x896xbf16, #tpu.memory_space<vmem>>, %arg4: memref<8x896xf32, #tpu.memory_space<vmem>>) attributes {dimension_semantics = [], scalar_prefetch = 0 : i64, scratch_operands = 0 : i64, tpu.core_type = #tpu.core_type<tc>} {
    %c0 = arith.constant 0 : index
    %c0_0 = arith.constant 0 : index
    %0 = vector.load %arg0[%c0, %c0_0] : memref<8x128xbf16, #tpu.memory_space<vmem>>, vector<8x128xbf16>
    %c0_1 = arith.constant 0 : index
    %c0_2 = arith.constant 0 : index
    %1 = vector.load %arg1[%c0_1, %c0_2] : memref<128x256xbf16, #tpu.memory_space<vmem>>, vector<128x256xbf16>
    %cst = arith.constant dense<0.000000e+00> : vector<8x256xf32>
    %2 = tpu.matmul %0, %1, %cst {dimension_numbers = #tpu.dot_dimension_numbers<[1], [0], [0], [1], [0, 0, 1, 1], [], []>} : vector<8x128xbf16>, vector<128x256xbf16>, vector<8x256xf32> -> vector<8x256xf32>
    %cst_3 = arith.constant 0.000000e+00 : f32
    %3 = vector.broadcast %cst_3 : f32 to vector<8x256xf32>
    %4 = arith.maximumf %2, %3 : vector<8x256xf32>
    %5 = arith.truncf %4 : vector<8x256xf32> to vector<8x256xbf16>
    %c0_4 = arith.constant 0 : index
    %c0_5 = arith.constant 0 : index
    %6 = vector.load %arg2[%c0_4, %c0_5] : memref<256x256xbf16, #tpu.memory_space<vmem>>, vector<256x256xbf16>
    %cst_6 = arith.constant dense<0.000000e+00> : vector<8x256xf32>
    %7 = tpu.matmul %5, %6, %cst_6 {dimension_numbers = #tpu.dot_dimension_numbers<[1], [0], [0], [1], [0, 0, 1, 1], [], []>} : vector<8x256xbf16>, vector<256x256xbf16>, vector<8x256xf32> -> vector<8x256xf32>
    %cst_7 = arith.constant 0.000000e+00 : f32
    %8 = vector.broadcast %cst_7 : f32 to vector<8x256xf32>
    %9 = arith.maximumf %7, %8 : vector<8x256xf32>
    %10 = arith.truncf %9 : vector<8x256xf32> to vector<8x256xbf16>
    %c0_8 = arith.constant 0 : index
    %c0_9 = arith.constant 0 : index
    %11 = vector.load %arg3[%c0_8, %c0_9] : memref<256x896xbf16, #tpu.memory_space<vmem>>, vector<256x896xbf16>
    %cst_10 = arith.constant dense<0.000000e+00> : vector<8x896xf32>
    %12 = tpu.matmul %10, %11, %cst_10 {dimension_numbers = #tpu.dot_dimension_numbers<[1], [0], [0], [1], [0, 0, 1, 1], [], []>} : vector<8x256xbf16>, vector<256x896xbf16>, vector<8x896xf32> -> vector<8x896xf32>
    %c0_11 = arith.constant 0 : index
    %c0_12 = arith.constant 0 : index
    %13 = vector.load %arg4[%c0_11, %c0_12] : memref<8x896xf32, #tpu.memory_space<vmem>>, vector<8x896xf32>
    tpu.vector_store %arg4[%c0_11, %c0_12], %12 {strides = array<i32>} : memref<8x896xf32, #tpu.memory_space<vmem>>, vector<8x896xf32>,
    return
  }
}

</mosaic_0001>

<llo_original>
// kernel: p_obs_logits_pallas.1
$region0: #{p_obs_logits_pallas.1}
  #allocation0 [shape = 'u32[]', space=smem, size = 0x4, offset = 0x4, fixed_abs, tag = 'smem constant byte address 0x4 - core index']
  #allocation1 [shape = 'u32[72,128]{1,0:T(1,128)}', space=vmem, size = 0x9000, scoped, tag = 'internal scratch']
  %s0 = inlined_call_operand.vmem [shape: bf16[8,128], index: 0, kind: input, shape index: {}]
  %s1 = inlined_call_operand.hbm [shape: bf16[128,256], index: 1, kind: input, shape index: {}]
  %s2 = inlined_call_operand.hbm [shape: bf16[256,256], index: 2, kind: input, shape index: {}]
  %s3 = inlined_call_operand.hbm [shape: bf16[256,896], index: 3, kind: input, shape index: {}]
  %s4 = inlined_call_operand.vmem [shape: f32[8,896], index: 4, kind: output, shape index: {}]
  %s5 = sld [smem:[#allocation0]]
  $region38: #{p_obs_logits_pallas.1} parent=0
    _
  %s7 = ssub.s32 1, %s5
  %s8 = scalar_select 0, %s7, %s5
  $region1: #{p_obs_logits_pallas.1} parent=0
    #allocation2 [shape = 'u8[65536]{0}', space=vmem, size = 0x10000, scoped, tag = 'input window, operand 1, single buffered']
    #allocation3 [shape = 's32[1]{0}', space=sflag, size = 0x4, scoped, tag = 'scoped memory for p_obs_logits_pallas.1']
    #allocation4 [shape = 'u8[131072]{0}', space=vmem, size = 0x20000, scoped, tag = 'input window, operand 2, single buffered']
    #allocation5 [shape = 's32[1]{0}', space=sflag, size = 0x4, scoped, tag = 'scoped memory for p_obs_logits_pallas.1']
    #allocation6 [shape = 'u8[458752]{0}', space=vmem, size = 0x70000, scoped, tag = 'input window, operand 3, single buffered']
    %9 = vsyncpa [#allocation3], 0
    %10 = vsyncpa [#allocation5], 0
    // Predicated region
    $region2: #{p_obs_logits_pallas.1} parent=1 // pred_check
      _
    $region3: #{p_obs_logits_pallas.1} parent=1 // pred_check_branch
      %12 = sbr.rel (0) target = $region5
    $region4: #{p_obs_logits_pallas.1} parent=1 // pred_region
      _
    $region5: #{p_obs_logits_pallas.1} parent=1 // pred_fallthru
      _
    // Predicated region
    $region6: #{p_obs_logits_pallas.1} parent=1 // pred_check
      _
    $region7: #{p_obs_logits_pallas.1} parent=1 // pred_check_branch
      %14 = sbr.rel (0) target = $region9
    $region8: #{p_obs_logits_pallas.1} parent=1 // pred_region
      %16 = vsyncadd [#allocation3], 0
      %s17 = sshll.u32 %s1, 4
      %s18 = int_to_ptr.hbm [resolvable:$true] %s17
      %s19 = sshll.u32 [#allocation2], 4
      %s20 = int_to_ptr.vmem [resolvable:$true] %s19
      %25 = dma.hbm_to_vmem [thread:$0]  %s18, 2048, %s20, [#allocation3], 128, 128, 8
    $region9: #{p_obs_logits_pallas.1} parent=1 // pred_fallthru
      _
    // Predicated region
    $region10: #{p_obs_logits_pallas.1} parent=1 // pred_check
      _
    $region11: #{p_obs_logits_pallas.1} parent=1 // pred_check_branch
      %27 = sbr.rel (0) target = $region13
    $region12: #{p_obs_logits_pallas.1} parent=1 // pred_region
      %29 = vsyncadd [#allocation5], 0
      %s30 = sshll.u32 %s2, 4
      %s31 = int_to_ptr.hbm [resolvable:$true] %s30
      %s32 = sshll.u32 [#allocation4], 4
      %s33 = int_to_ptr.vmem [resolvable:$true] %s32
      %38 = dma.hbm_to_vmem [thread:$0]  %s31, 4096, %s33, [#allocation5], 128, 128, 8
    $region13: #{p_obs_logits_pallas.1} parent=1 // pred_fallthru
      _
    // Predicated region
    $region14: #{p_obs_logits_pallas.1} parent=1 // pred_check
      _
    $region15: #{p_obs_logits_pallas.1} parent=1 // pred_check_branch
      %40 = sbr.rel (0) target = $region17
    $region16: #{p_obs_logits_pallas.1} parent=1 // pred_region
      %42 = vsyncadd [#allocation5], 0
      %s43 = sshll.u32 %s3, 4
      %s44 = int_to_ptr.hbm [resolvable:$true] %s43
      %s45 = sshll.u32 [#allocation6], 4
      %s46 = int_to_ptr.vmem [resolvable:$true] %s45
      %51 = dma.hbm_to_vmem [thread:$0]  %s44, 14336, %s46, [#allocation5], 448, 448, 28
    $region17: #{p_obs_logits_pallas.1} parent=1 // pred_fallthru
      _
    // Predicated region
    $region18: #{p_obs_logits_pallas.1} parent=1 // pred_check
      _
    $region19: #{p_obs_logits_pallas.1} parent=1 // pred_check_branch
      %53 = sbr.rel (0) target = $region21
    $region20: #{p_obs_logits_pallas.1} parent=1 // pred_region
      %55 = dma.done [#allocation3], 2048
    $region21: #{p_obs_logits_pallas.1} parent=1 // pred_fallthru
      _
    // Predicated region
    $region22: #{p_obs_logits_pallas.1} parent=1 // pred_check
      _
    $region23: #{p_obs_logits_pallas.1} parent=1 // pred_check_branch
      %57 = sbr.rel (0) target = $region25
    $region24: #{p_obs_logits_pallas.1} parent=1 // pred_region
      %59 = dma.done [#allocation5], 4096
    $region25: #{p_obs_logits_pallas.1} parent=1 // pred_fallthru
      _
    // Predicated region
    $region26: #{p_obs_logits_pallas.1} parent=1 // pred_check
      _
    $region27: #{p_obs_logits_pallas.1} parent=1 // pred_check_branch
      %61 = sbr.rel (0) target = $region29
    $region28: #{p_obs_logits_pallas.1} parent=1 // pred_region
      %63 = dma.done [#allocation5], 14336
    $region29: #{p_obs_logits_pallas.1} parent=1 // pred_fallthru
      _
    %v64 = vld [vmem:[%s0] sm:$0xf]
    %v65 = vld [vmem:[#allocation2] sm:$0xff]
    %v66 = vld [vmem:[#allocation2 + $0x8] sm:$0xff]
    %v67 = vld [vmem:[#allocation2 + $0x10] sm:$0xff]
    %v68 = vld [vmem:[#allocation2 + $0x18] sm:$0xff]
    %v69 = vld [vmem:[#allocation2 + $0x20] sm:$0xff]
    %v70 = vld [vmem:[#allocation2 + $0x28] sm:$0xff]
    %v71 = vld [vmem:[#allocation2 + $0x30] sm:$0xff]
    %v72 = vld [vmem:[#allocation2 + $0x38] sm:$0xff]
    %v73 = vld [vmem:[#allocation2 + $0x40] sm:$0xff]
    %v74 = vld [vmem:[#allocation2 + $0x48] sm:$0xff]
    %v75 = vld [vmem:[#allocation2 + $0x50] sm:$0xff]
    %v76 = vld [vmem:[#allocation2 + $0x58] sm:$0xff]
    %v77 = vld [vmem:[#allocation2 + $0x60] sm:$0xff]
    %v78 = vld [vmem:[#allocation2 + $0x68] sm:$0xff]
    %v79 = vld [vmem:[#allocation2 + $0x70] sm:$0xff]
    %v80 = vld [vmem:[#allocation2 + $0x78] sm:$0xff]
    %v97 = vunpack.c.l.b16 %v65
    %v98 = vunpack.c.h.b16 %v65
    %v99 = vunpack.c.l.b16 %v66
    %v100 = vunpack.c.h.b16 %v66
    %v101 = vunpack.c.l.b16 %v67
    %v102 = vunpack.c.h.b16 %v67
    %v103 = vunpack.c.l.b16 %v68
    %v104 = vunpack.c.h.b16 %v68
    %v105 = vunpack.c.l.b16 %v69
    %v106 = vunpack.c.h.b16 %v69
    %v107 = vunpack.c.l.b16 %v70
    %v108 = vunpack.c.h.b16 %v70
    %v109 = vunpack.c.l.b16 %v71
    %v110 = vunpack.c.h.b16 %v71
    %v111 = vunpack.c.l.b16 %v72
    %v112 = vunpack.c.h.b16 %v72
    %v113 = vunpack.c.l.b16 %v73
    %v114 = vunpack.c.h.b16 %v73
    %v115 = vunpack.c.l.b16 %v74
    %v116 = vunpack.c.h.b16 %v74
    %v117 = vunpack.c.l.b16 %v75
    %v118 = vunpack.c.h.b16 %v75
    %v119 = vunpack.c.l.b16 %v76
    %v120 = vunpack.c.h.b16 %v76
    %v121 = vunpack.c.l.b16 %v77
    %v122 = vunpack.c.h.b16 %v77
    %v123 = vunpack.c.l.b16 %v78
    %v124 = vunpack.c.h.b16 %v78
    %v125 = vunpack.c.l.b16 %v79
    %v126 = vunpack.c.h.b16 %v79
    %v127 = vunpack.c.l.b16 %v80
    %v128 = vunpack.c.h.b16 %v80
    %v129 = vpack.c.b16 %v99, %v97
    %v130 = vpack.c.b16 %v100, %v98
    %v131 = vpack.c.b16 %v103, %v101
    %v132 = vpack.c.b16 %v104, %v102
    %v133 = vpack.c.b16 %v107, %v105
    %v134 = vpack.c.b16 %v108, %v106
    %v135 = vpack.c.b16 %v111, %v109
    %v136 = vpack.c.b16 %v112, %v110
    %v137 = vpack.c.b16 %v115, %v113
    %v138 = vpack.c.b16 %v116, %v114
    %v139 = vpack.c.b16 %v119, %v117
    %v140 = vpack.c.b16 %v120, %v118
    %v141 = vpack.c.b16 %v123, %v121
    %v142 = vpack.c.b16 %v124, %v122
    %v143 = vpack.c.b16 %v127, %v125
    %v144 = vpack.c.b16 %v128, %v126
    %161 = vmatpush.bf16.msra.mxu0 %v143
    %162 = vmatpush.bf16.msra.mxu0 %v141
    %163 = vmatpush.bf16.msra.mxu0 %v139
    %164 = vmatpush.bf16.msra.mxu0 %v137
    %165 = vmatpush.bf16.msra.mxu0 %v135
    %166 = vmatpush.bf16.msra.mxu0 %v133
    %167 = vmatpush.bf16.msra.mxu0 %v131
    %168 = vmatpush.bf16.msra.mxu0 %v129
    %169 = vmatmul.bf16.gmra.mxu0 %v64
    %v170 = vpop.f32.mrf.mxu0
    %v171 = vadd.f32 0.0, %v170
    %v172 = vpop.f32.mrf.mxu0
    %173 = vdwg.mxu0
    %174 = vmatpush.bf16.msra.mxu0 %v144
    %175 = vmatpush.bf16.msra.mxu0 %v142
    %176 = vmatpush.bf16.msra.mxu0 %v140
    %177 = vmatpush.bf16.msra.mxu0 %v138
    %178 = vmatpush.bf16.msra.mxu0 %v136
    %179 = vmatpush.bf16.msra.mxu0 %v134
    %180 = vmatpush.bf16.msra.mxu0 %v132
    %181 = vmatpush.bf16.msra.mxu0 %v130
    %182 = vmatmul.bf16.gmra.mxu0 %v64
    %v183 = vpop.f32.mrf.mxu0
    %v184 = vadd.f32 0.0, %v183
    %v185 = vpop.f32.mrf.mxu0
    %186 = vdwg.mxu0
    %v187 = vmax.f32 %v171, 0.0
    %v188 = vmax.f32 %v184, 0.0
    %v189 = vpack.c.bf16 %v187, %v187
    %v190 = vpack.c.bf16 %v188, %v188
    %v191 = vld [vmem:[#allocation4] sm:$0xff]
    %v192 = vld [vmem:[#allocation4 + $0x8] sm:$0xff]
    %v193 = vld [vmem:[#allocation4 + $0x10] sm:$0xff]
    %v194 = vld [vmem:[#allocation4 + $0x18] sm:$0xff]
    %v195 = vld [vmem:[#allocation4 + $0x20] sm:$0xff]
    %v196 = vld [vmem:[#allocation4 + $0x28] sm:$0xff]
    %v197 = vld [vmem:[#allocation4 + $0x30] sm:$0xff]
    %v198 = vld [vmem:[#allocation4 + $0x38] sm:$0xff]
    %v199 = vld [vmem:[#allocation4 + $0x40] sm:$0xff]
    %v200 = vld [vmem:[#allocation4 + $0x48] sm:$0xff]
    %v201 = vld [vmem:[#allocation4 + $0x50] sm:$0xff]
    %v202 = vld [vmem:[#allocation4 + $0x58] sm:$0xff]
    %v203 = vld [vmem:[#allocation4 + $0x60] sm:$0xff]
    %v204 = vld [vmem:[#allocation4 + $0x68] sm:$0xff]
    %v205 = vld [vmem:[#allocation4 + $0x70] sm:$0xff]
    %v206 = vld [vmem:[#allocation4 + $0x78] sm:$0xff]
    %v207 = vld [vmem:[#allocation4 + $0x80] sm:$0xff]
    %v208 = vld [vmem:[#allocation4 + $0x88] sm:$0xff]
    %v209 = vld [vmem:[#allocation4 + $0x90] sm:$0xff]
    %v210 = vld [vmem:[#allocation4 + $0x98] sm:$0xff]
    %v211 = vld [vmem:[#allocation4 + $0xa0] sm:$0xff]
    %v212 = vld [vmem:[#allocation4 + $0xa8] sm:$0xff]
    %v213 = vld [vmem:[#allocation4 + $0xb0] sm:$0xff]
    %v214 = vld [vmem:[#allocation4 + $0xb8] sm:$0xff]
    %v215 = vld [vmem:[#allocation4 + $0xc0] sm:$0xff]
    %v216 = vld [vmem:[#allocation4 + $0xc8] sm:$0xff]
    %v217 = vld [vmem:[#allocation4 + $0xd0] sm:$0xff]
    %v218 = vld [vmem:[#allocation4 + $0xd8] sm:$0xff]
    %v219 = vld [vmem:[#allocation4 + $0xe0] sm:$0xff]
    %v220 = vld [vmem:[#allocation4 + $0xe8] sm:$0xff]
    %v221 = vld [vmem:[#allocation4 + $0xf0] sm:$0xff]
    %v222 = vld [vmem:[#allocation4 + $0xf8] sm:$0xff]
    %v255 = vunpack.c.l.b16 %v191
    %v256 = vunpack.c.h.b16 %v191
    %v257 = vunpack.c.l.b16 %v192
    %v258 = vunpack.c.h.b16 %v192
    %v259 = vunpack.c.l.b16 %v193
    %v260 = vunpack.c.h.b16 %v193
    %v261 = vunpack.c.l.b16 %v194
    %v262 = vunpack.c.h.b16 %v194
    %v263 = vunpack.c.l.b16 %v195
    %v264 = vunpack.c.h.b16 %v195
    %v265 = vunpack.c.l.b16 %v196
    %v266 = vunpack.c.h.b16 %v196
    %v267 = vunpack.c.l.b16 %v197
    %v268 = vunpack.c.h.b16 %v197
    %v269 = vunpack.c.l.b16 %v198
    %v270 = vunpack.c.h.b16 %v198
    %v271 = vunpack.c.l.b16 %v199
    %v272 = vunpack.c.h.b16 %v199
    %v273 = vunpack.c.l.b16 %v200
    %v274 = vunpack.c.h.b16 %v200
    %v275 = vunpack.c.l.b16 %v201
    %v276 = vunpack.c.h.b16 %v201
    %v277 = vunpack.c.l.b16 %v202
    %v278 = vunpack.c.h.b16 %v202
    %v279 = vunpack.c.l.b16 %v203
    %v280 = vunpack.c.h.b16 %v203
    %v281 = vunpack.c.l.b16 %v204
    %v282 = vunpack.c.h.b16 %v204
    %v283 = vunpack.c.l.b16 %v205
    %v284 = vunpack.c.h.b16 %v205
    %v285 = vunpack.c.l.b16 %v206
    %v286 = vunpack.c.h.b16 %v206
    %v287 = vunpack.c.l.b16 %v207
    %v288 = vunpack.c.h.b16 %v207
    %v289 = vunpack.c.l.b16 %v208
    %v290 = vunpack.c.h.b16 %v208
    %v291 = vunpack.c.l.b16 %v209
    %v292 = vunpack.c.h.b16 %v209
    %v293 = vunpack.c.l.b16 %v210
    %v294 = vunpack.c.h.b16 %v210
    %v295 = vunpack.c.l.b16 %v211
    %v296 = vunpack.c.h.b16 %v211
    %v297 = vunpack.c.l.b16 %v212
    %v298 = vunpack.c.h.b16 %v212
    %v299 = vunpack.c.l.b16 %v213
    %v300 = vunpack.c.h.b16 %v213
    %v301 = vunpack.c.l.b16 %v214
    %v302 = vunpack.c.h.b16 %v214
    %v303 = vunpack.c.l.b16 %v215
    %v304 = vunpack.c.h.b16 %v215
    %v305 = vunpack.c.l.b16 %v216
    %v306 = vunpack.c.h.b16 %v216
    %v307 = vunpack.c.l.b16 %v217
    %v308 = vunpack.c.h.b16 %v217
    %v309 = vunpack.c.l.b16 %v218
    %v310 = vunpack.c.h.b16 %v218
    %v311 = vunpack.c.l.b16 %v219
    %v312 = vunpack.c.h.b16 %v219
    %v313 = vunpack.c.l.b16 %v220
    %v314 = vunpack.c.h.b16 %v220
    %v315 = vunpack.c.l.b16 %v221
    %v316 = vunpack.c.h.b16 %v221
    %v317 = vunpack.c.l.b16 %v222
    %v318 = vunpack.c.h.b16 %v222
    %v319 = vpack.c.b16 %v257, %v255
    %v320 = vpack.c.b16 %v258, %v256
    %v321 = vpack.c.b16 %v261, %v259
    %v322 = vpack.c.b16 %v262, %v260
    %v323 = vpack.c.b16 %v265, %v263
    %v324 = vpack.c.b16 %v266, %v264
    %v325 = vpack.c.b16 %v269, %v267
    %v326 = vpack.c.b16 %v270, %v268
    %v327 = vpack.c.b16 %v273, %v271
    %v328 = vpack.c.b16 %v274, %v272
    %v329 = vpack.c.b16 %v277, %v275
    %v330 = vpack.c.b16 %v278, %v276
    %v331 = vpack.c.b16 %v281, %v279
    %v332 = vpack.c.b16 %v282, %v280
    %v333 = vpack.c.b16 %v285, %v283
    %v334 = vpack.c.b16 %v286, %v284
    %v335 = vpack.c.b16 %v289, %v287
    %v336 = vpack.c.b16 %v290, %v288
    %v337 = vpack.c.b16 %v293, %v291
    %v338 = vpack.c.b16 %v294, %v292
    %v339 = vpack.c.b16 %v297, %v295
    %v340 = vpack.c.b16 %v298, %v296
    %v341 = vpack.c.b16 %v301, %v299
    %v342 = vpack.c.b16 %v302, %v300
    %v343 = vpack.c.b16 %v305, %v303
    %v344 = vpack.c.b16 %v306, %v304
    %v345 = vpack.c.b16 %v309, %v307
    %v346 = vpack.c.b16 %v310, %v308
    %v347 = vpack.c.b16 %v313, %v311
    %v348 = vpack.c.b16 %v314, %v312
    %v349 = vpack.c.b16 %v317, %v315
    %v350 = vpack.c.b16 %v318, %v316
    %383 = vmatpush.bf16.msra.mxu0 %v333
    %384 = vmatpush.bf16.msra.mxu0 %v331
    %385 = vmatpush.bf16.msra.mxu0 %v329
    %386 = vmatpush.bf16.msra.mxu0 %v327
    %387 = vmatpush.bf16.msra.mxu0 %v325
    %388 = vmatpush.bf16.msra.mxu0 %v323
    %389 = vmatpush.bf16.msra.mxu0 %v321
    %390 = vmatpush.bf16.msra.mxu0 %v319
    %391 = vmatmul.bf16.gmra.mxu0 %v189
    %v392 = vpop.f32.mrf.mxu0
    %v393 = vadd.f32 0.0, %v392
    %v394 = vpop.f32.mrf.mxu0
    %395 = vdwg.mxu0
    %396 = vmatpush.bf16.msra.mxu0 %v349
    %397 = vmatpush.bf16.msra.mxu0 %v347
    %398 = vmatpush.bf16.msra.mxu0 %v345
    %399 = vmatpush.bf16.msra.mxu0 %v343
    %400 = vmatpush.bf16.msra.mxu0 %v341
    %401 = vmatpush.bf16.msra.mxu0 %v339
    %402 = vmatpush.bf16.msra.mxu0 %v337
    %403 = vmatpush.bf16.msra.mxu0 %v335
    %404 = vmatmul.bf16.gmra.mxu0 %v190
    %v405 = vpop.f32.mrf.mxu0
    %v406 = vadd.f32 %v393, %v405
    %v407 = vpop.f32.mrf.mxu0
    %408 = vdwg.mxu0
    %409 = vmatpush.bf16.msra.mxu0 %v334
    %410 = vmatpush.bf16.msra.mxu0 %v332
    %411 = vmatpush.bf16.msra.mxu0 %v330
    %412 = vmatpush.bf16.msra.mxu0 %v328
    %413 = vmatpush.bf16.msra.mxu0 %v326
    %414 = vmatpush.bf16.msra.mxu0 %v324
    %415 = vmatpush.bf16.msra.mxu0 %v322
    %416 = vmatpush.bf16.msra.mxu0 %v320
    %417 = vmatmul.bf16.gmra.mxu0 %v189
    %v418 = vpop.f32.mrf.mxu0
    %v419 = vadd.f32 0.0, %v418
    %v420 = vpop.f32.mrf.mxu0
    %421 = vdwg.mxu0
    %422 = vmatpush.bf16.msra.mxu0 %v350
    %423 = vmatpush.bf16.msra.mxu0 %v348
    %424 = vmatpush.bf16.msra.mxu0 %v346
    %425 = vmatpush.bf16.msra.mxu0 %v344
    %426 = vmatpush.bf16.msra.mxu0 %v342
    %427 = vmatpush.bf16.msra.mxu0 %v340
    %428 = vmatpush.bf16.msra.mxu0 %v338
    %429 = vmatpush.bf16.msra.mxu0 %v336
    %430 = vmatmul.bf16.gmra.mxu0 %v190
    %v431 = vpop.f32.mrf.mxu0
    %v432 = vadd.f32 %v419, %v431
    %v433 = vpop.f32.mrf.mxu0
    %434 = vdwg.mxu0
    %v435 = vmax.f32 %v406, 0.0
    %v436 = vmax.f32 %v432, 0.0
    %v437 = vpack.c.bf16 %v435, %v435
    %v438 = vpack.c.bf16 %v436, %v436
    %v439 = vld [vmem:[#allocation6] sm:$0xff]
    %v440 = vld [vmem:[#allocation6 + $0x8] sm:$0xff]
    %v441 = vld [vmem:[#allocation6 + $0x10] sm:$0xff]
    %v442 = vld [vmem:[#allocation6 + $0x18] sm:$0xf]
    %v443 = vld [vmem:[#allocation6 + $0x1c] sm:$0xff]
    %v444 = vld [vmem:[#allocation6 + $0x24] sm:$0xff]
    %v445 = vld [vmem:[#allocation6 + $0x2c] sm:$0xff]
    %v446 = vld [vmem:[#allocation6 + $0x34] sm:$0xf]
    %v447 = vld [vmem:[#allocation6 + $0x38] sm:$0xff]
    %v448 = vld [vmem:[#allocation6 + $0x40] sm:$0xff]
    %v449 = vld [vmem:[#allocation6 + $0x48] sm:$0xff]
    %v450 = vld [vmem:[#allocation6 + $0x50] sm:$0xf]
    %v451 = vld [vmem:[#allocation6 + $0x54] sm:$0xff]
    %v452 = vld [vmem:[#allocation6 + $0x5c] sm:$0xff]
    %v453 = vld [vmem:[#allocation6 + $0x64] sm:$0xff]
    %v454 = vld [vmem:[#allocation6 + $0x6c] sm:$0xf]
    %v455 = vld [vmem:[#allocation6 + $0x70] sm:$0xff]
    %v456 = vld [vmem:[#allocation6 + $0x78] sm:$0xff]
    %v457 = vld [vmem:[#allocation6 + $0x80] sm:$0xff]
    %v458 = vld [vmem:[#allocation6 + $0x88] sm:$0xf]
    %v459 = vld [vmem:[#allocation6 + $0x8c] sm:$0xff]
    %v460 = vld [vmem:[#allocation6 + $0x94] sm:$0xff]
    %v461 = vld [vmem:[#allocation6 + $0x9c] sm:$0xff]
    %v462 = vld [vmem:[#allocation6 + $0xa4] sm:$0xf]
    %v463 = vld [vmem:[#allocation6 + $0xa8] sm:$0xff]
    %v464 = vld [vmem:[#allocation6 + $0xb0] sm:$0xff]
    %v465 = vld [vmem:[#allocation6 + $0xb8] sm:$0xff]
    %v466 = vld [vmem:[#allocation6 + $0xc0] sm:$0xf]
    %v467 = vld [vmem:[#allocation6 + $0xc4] sm:$0xff]
    %v468 = vld [vmem:[#allocation6 + $0xcc] sm:$0xff]
    %v469 = vld [vmem:[#allocation6 + $0xd4] sm:$0xff]
    %v470 = vld [vmem:[#allocation6 + $0xdc] sm:$0xf]
    %v471 = vld [vmem:[#allocation6 + $0xe0] sm:$0xff]
    %v472 = vld [vmem:[#allocation6 + $0xe8] sm:$0xff]
    %v473 = vld [vmem:[#allocation6 + $0xf0] sm:$0xff]
    %v474 = vld [vmem:[#allocation6 + $0xf8] sm:$0xf]
    %v475 = vld [vmem:[#allocation6 + $0xfc] sm:$0xff]
    %v476 = vld [vmem:[#allocation6 + $0x104] sm:$0xff]
    %v477 = vld [vmem:[#allocation6 + $0x10c] sm:$0xff]
    %v478 = vld [vmem:[#allocation6 + $0x114] sm:$0xf]
    %v479 = vld [vmem:[#allocation6 + $0x118] sm:$0xff]
    %v480 = vld [vmem:[#allocation6 + $0x120] sm:$0xff]
    %v481 = vld [vmem:[#allocation6 + $0x128] sm:$0xff]
    %v482 = vld [vmem:[#allocation6 + $0x130] sm:$0xf]
    %v483 = vld [vmem:[#allocation6 + $0x134] sm:$0xff]
    %v484 = vld [vmem:[#allocation6 + $0x13c] sm:$0xff]
    %v485 = vld [vmem:[#allocation6 + $0x144] sm:$0xff]
    %v486 = vld [vmem:[#allocation6 + $0x14c] sm:$0xf]
    %v487 = vld [vmem:[#allocation6 + $0x150] sm:$0xff]
    %v488 = vld [vmem:[#allocation6 + $0x158] sm:$0xff]
    %v489 = vld [vmem:[#allocation6 + $0x160] sm:$0xff]
    %v490 = vld [vmem:[#allocation6 + $0x168] sm:$0xf]
    %v491 = vld [vmem:[#allocation6 + $0x16c] sm:$0xff]
    %v492 = vld [vmem:[#allocation6 + $0x174] sm:$0xff]
    %v493 = vld [vmem:[#allocation6 + $0x17c] sm:$0xff]
    %v494 = vld [vmem:[#allocation6 + $0x184] sm:$0xf]
    %v495 = vld [vmem:[#allocation6 + $0x188] sm:$0xff]
    %v496 = vld [vmem:[#allocation6 + $0x190] sm:$0xff]
    %v497 = vld [vmem:[#allocation6 + $0x198] sm:$0xff]
    %v498 = vld [vmem:[#allocation6 + $0x1a0] sm:$0xf]
    %v499 = vld [vmem:[#allocation6 + $0x1a4] sm:$0xff]
    %v500 = vld [vmem:[#allocation6 + $0x1ac] sm:$0xff]
    %v501 = vld [vmem:[#allocation6 + $0x1b4] sm:$0xff]
    %v502 = vld [vmem:[#allocation6 + $0x1bc] sm:$0xf]
    %v503 = vld [vmem:[#allocation6 + $0x1c0] sm:$0xff]
    %v504 = vld [vmem:[#allocation6 + $0x1c8] sm:$0xff]
    %v505 = vld [vmem:[#allocation6 + $0x1d0] sm:$0xff]
    %v506 = vld [vmem:[#allocation6 + $0x1d8] sm:$0xf]
    %v507 = vld [vmem:[#allocation6 + $0x1dc] sm:$0xff]
    %v508 = vld [vmem:[#allocation6 + $0x1e4] sm:$0xff]
    %v509 = vld [vmem:[#allocation6 + $0x1ec] sm:$0xff]
    %v510 = vld [vmem:[#allocation6 + $0x1f4] sm:$0xf]
    %v511 = vld [vmem:[#allocation6 + $0x1f8] sm:$0xff]
    %v512 = vld [vmem:[#allocation6 + $0x200] sm:$0xff]
    %v513 = vld [vmem:[#allocation6 + $0x208] sm:$0xff]
    %v514 = vld [vmem:[#allocation6 + $0x210] sm:$0xf]
    %v515 = vld [vmem:[#allocation6 + $0x214] sm:$0xff]
    %v516 = vld [vmem:[#allocation6 + $0x21c] sm:$0xff]
    %v517 = vld [vmem:[#allocation6 + $0x224] sm:$0xff]
    %v518 = vld [vmem:[#allocation6 + $0x22c] sm:$0xf]
    %v519 = vld [vmem:[#allocation6 + $0x230] sm:$0xff]
    %v520 = vld [vmem:[#allocation6 + $0x238] sm:$0xff]
    %v521 = vld [vmem:[#allocation6 + $0x240] sm:$0xff]
    %v522 = vld [vmem:[#allocation6 + $0x248] sm:$0xf]
    %v523 = vld [vmem:[#allocation6 + $0x24c] sm:$0xff]
    %v524 = vld [vmem:[#allocation6 + $0x254] sm:$0xff]
    %v525 = vld [vmem:[#allocation6 + $0x25c] sm:$0xff]
    %v526 = vld [vmem:[#allocation6 + $0x264] sm:$0xf]
    %v527 = vld [vmem:[#allocation6 + $0x268] sm:$0xff]
    %v528 = vld [vmem:[#allocation6 + $0x270] sm:$0xff]
    %v529 = vld [vmem:[#allocation6 + $0x278] sm:$0xff]
    %v530 = vld [vmem:[#allocation6 + $0x280] sm:$0xf]
    %v531 = vld [vmem:[#allocation6 + $0x284] sm:$0xff]
    %v532 = vld [vmem:[#allocation6 + $0x28c] sm:$0xff]
    %v533 = vld [vmem:[#allocation6 + $0x294] sm:$0xff]
    %v534 = vld [vmem:[#allocation6 + $0x29c] sm:$0xf]
    %v535 = vld [vmem:[#allocation6 + $0x2a0] sm:$0xff]
    %v536 = vld [vmem:[#allocation6 + $0x2a8] sm:$0xff]
    %v537 = vld [vmem:[#allocation6 + $0x2b0] sm:$0xff]
    %v538 = vld [vmem:[#allocation6 + $0x2b8] sm:$0xf]
    %v539 = vld [vmem:[#allocation6 + $0x2bc] sm:$0xff]
    %v540 = vld [vmem:[#allocation6 + $0x2c4] sm:$0xff]
    %v541 = vld [vmem:[#allocation6 + $0x2cc] sm:$0xff]
    %v542 = vld [vmem:[#allocation6 + $0x2d4] sm:$0xf]
    %v543 = vld [vmem:[#allocation6 + $0x2d8] sm:$0xff]
    %v544 = vld [vmem:[#allocation6 + $0x2e0] sm:$0xff]
    %v545 = vld [vmem:[#allocation6 + $0x2e8] sm:$0xff]
    %v546 = vld [vmem:[#allocation6 + $0x2f0] sm:$0xf]
    %v547 = vld [vmem:[#allocation6 + $0x2f4] sm:$0xff]
    %v548 = vld [vmem:[#allocation6 + $0x2fc] sm:$0xff]
    %v549 = vld [vmem:[#allocation6 + $0x304] sm:$0xff]
    %v550 = vld [vmem:[#allocation6 + $0x30c] sm:$0xf]
    %v551 = vld [vmem:[#allocation6 + $0x310] sm:$0xff]
    %v552 = vld [vmem:[#allocation6 + $0x318] sm:$0xff]
    %v553 = vld [vmem:[#allocation6 + $0x320] sm:$0xff]
    %v554 = vld [vmem:[#allocation6 + $0x328] sm:$0xf]
    %v555 = vld [vmem:[#allocation6 + $0x32c] sm:$0xff]
    %v556 = vld [vmem:[#allocation6 + $0x334] sm:$0xff]
    %v557 = vld [vmem:[#allocation6 + $0x33c] sm:$0xff]
    %v558 = vld [vmem:[#allocation6 + $0x344] sm:$0xf]
    %v559 = vld [vmem:[#allocation6 + $0x348] sm:$0xff]
    %v560 = vld [vmem:[#allocation6 + $0x350] sm:$0xff]
    %v561 = vld [vmem:[#allocation6 + $0x358] sm:$0xff]
    %v562 = vld [vmem:[#allocation6 + $0x360] sm:$0xf]
    %v563 = vld [vmem:[#allocation6 + $0x364] sm:$0xff]
    %v564 = vld [vmem:[#allocation6 + $0x36c] sm:$0xff]
    %v565 = vld [vmem:[#allocation6 + $0x374] sm:$0xff]
    %v566 = vld [vmem:[#allocation6 + $0x37c] sm:$0xf]
    %v695 = vunpack.c.l.b16 %v439
    %v696 = vunpack.c.h.b16 %v439
    %v697 = vunpack.c.l.b16 %v440
    %v698 = vunpack.c.h.b16 %v440
    %v699 = vunpack.c.l.b16 %v441
    %v700 = vunpack.c.h.b16 %v441
    %v701 = vunpack.c.l.b16 %v442
    %v702 = vunpack.c.l.b16 %v443
    %v703 = vunpack.c.h.b16 %v443
    %v704 = vunpack.c.l.b16 %v444
    %v705 = vunpack.c.h.b16 %v444
    %v706 = vunpack.c.l.b16 %v445
    %v707 = vunpack.c.h.b16 %v445
    %v708 = vunpack.c.l.b16 %v446
    %v709 = vunpack.c.l.b16 %v447
    %v710 = vunpack.c.h.b16 %v447
    %v711 = vunpack.c.l.b16 %v448
    %v712 = vunpack.c.h.b16 %v448
    %v713 = vunpack.c.l.b16 %v449
    %v714 = vunpack.c.h.b16 %v449
    %v715 = vunpack.c.l.b16 %v450
    %v716 = vunpack.c.l.b16 %v451
    %v717 = vunpack.c.h.b16 %v451
    %v718 = vunpack.c.l.b16 %v452
    %v719 = vunpack.c.h.b16 %v452
    %v720 = vunpack.c.l.b16 %v453
    %v721 = vunpack.c.h.b16 %v453
    %v722 = vunpack.c.l.b16 %v454
    %v723 = vunpack.c.l.b16 %v455
    %v724 = vunpack.c.h.b16 %v455
    %v725 = vunpack.c.l.b16 %v456
    %v726 = vunpack.c.h.b16 %v456
    %v727 = vunpack.c.l.b16 %v457
    %v728 = vunpack.c.h.b16 %v457
    %v729 = vunpack.c.l.b16 %v458
    %v730 = vunpack.c.l.b16 %v459
    %v731 = vunpack.c.h.b16 %v459
    %v732 = vunpack.c.l.b16 %v460
    %v733 = vunpack.c.h.b16 %v460
    %v734 = vunpack.c.l.b16 %v461
    %v735 = vunpack.c.h.b16 %v461
    %v736 = vunpack.c.l.b16 %v462
    %v737 = vunpack.c.l.b16 %v463
    %v738 = vunpack.c.h.b16 %v463
    %v739 = vunpack.c.l.b16 %v464
    %v740 = vunpack.c.h.b16 %v464
    %v741 = vunpack.c.l.b16 %v465
    %v742 = vunpack.c.h.b16 %v465
    %v743 = vunpack.c.l.b16 %v466
    %v744 = vunpack.c.l.b16 %v467
    %v745 = vunpack.c.h.b16 %v467
    %v746 = vunpack.c.l.b16 %v468
    %v747 = vunpack.c.h.b16 %v468
    %v748 = vunpack.c.l.b16 %v469
    %v749 = vunpack.c.h.b16 %v469
    %v750 = vunpack.c.l.b16 %v470
    %v751 = vunpack.c.l.b16 %v471
    %v752 = vunpack.c.h.b16 %v471
    %v753 = vunpack.c.l.b16 %v472
    %v754 = vunpack.c.h.b16 %v472
    %v755 = vunpack.c.l.b16 %v473
    %v756 = vunpack.c.h.b16 %v473
    %v757 = vunpack.c.l.b16 %v474
    %v758 = vunpack.c.l.b16 %v475
    %v759 = vunpack.c.h.b16 %v475
    %v760 = vunpack.c.l.b16 %v476
    %v761 = vunpack.c.h.b16 %v476
    %v762 = vunpack.c.l.b16 %v477
    %v763 = vunpack.c.h.b16 %v477
    %v764 = vunpack.c.l.b16 %v478
    %v765 = vunpack.c.l.b16 %v479
    %v766 = vunpack.c.h.b16 %v479
    %v767 = vunpack.c.l.b16 %v480
    %v768 = vunpack.c.h.b16 %v480
    %v769 = vunpack.c.l.b16 %v481
    %v770 = vunpack.c.h.b16 %v481
    %v771 = vunpack.c.l.b16 %v482
    %v772 = vunpack.c.l.b16 %v483
    %v773 = vunpack.c.h.b16 %v483
    %v774 = vunpack.c.l.b16 %v484
    %v775 = vunpack.c.h.b16 %v484
    %v776 = vunpack.c.l.b16 %v485
    %v777 = vunpack.c.h.b16 %v485
    %v778 = vunpack.c.l.b16 %v486
    %v779 = vunpack.c.l.b16 %v487
    %v780 = vunpack.c.h.b16 %v487
    %v781 = vunpack.c.l.b16 %v488
    %v782 = vunpack.c.h.b16 %v488
    %v783 = vunpack.c.l.b16 %v489
    %v784 = vunpack.c.h.b16 %v489
    %v785 = vunpack.c.l.b16 %v490
    %v786 = vunpack.c.l.b16 %v491
    %v787 = vunpack.c.h.b16 %v491
    %v788 = vunpack.c.l.b16 %v492
    %v789 = vunpack.c.h.b16 %v492
    %v790 = vunpack.c.l.b16 %v493
    %v791 = vunpack.c.h.b16 %v493
    %v792 = vunpack.c.l.b16 %v494
    %v793 = vunpack.c.l.b16 %v495
    %v794 = vunpack.c.h.b16 %v495
    %v795 = vunpack.c.l.b16 %v496
    %v796 = vunpack.c.h.b16 %v496
    %v797 = vunpack.c.l.b16 %v497
    %v798 = vunpack.c.h.b16 %v497
    %v799 = vunpack.c.l.b16 %v498
    %v800 = vunpack.c.l.b16 %v499
    %v801 = vunpack.c.h.b16 %v499
    %v802 = vunpack.c.l.b16 %v500
    %v803 = vunpack.c.h.b16 %v500
    %v804 = vunpack.c.l.b16 %v501
    %v805 = vunpack.c.h.b16 %v501
    %v806 = vunpack.c.l.b16 %v502
    %v807 = vunpack.c.l.b16 %v503
    %v808 = vunpack.c.h.b16 %v503
    %v809 = vunpack.c.l.b16 %v504
    %v810 = vunpack.c.h.b16 %v504
    %v811 = vunpack.c.l.b16 %v505
    %v812 = vunpack.c.h.b16 %v505
    %v813 = vunpack.c.l.b16 %v506
    %v814 = vunpack.c.l.b16 %v507
    %v815 = vunpack.c.h.b16 %v507
    %v816 = vunpack.c.l.b16 %v508
    %v817 = vunpack.c.h.b16 %v508
    %v818 = vunpack.c.l.b16 %v509
    %v819 = vunpack.c.h.b16 %v509
    %v820 = vunpack.c.l.b16 %v510
    %v821 = vunpack.c.l.b16 %v511
    %v822 = vunpack.c.h.b16 %v511
    %v823 = vunpack.c.l.b16 %v512
    %v824 = vunpack.c.h.b16 %v512
    %v825 = vunpack.c.l.b16 %v513
    %v826 = vunpack.c.h.b16 %v513
    %v827 = vunpack.c.l.b16 %v514
    %v828 = vunpack.c.l.b16 %v515
    %v829 = vunpack.c.h.b16 %v515
    %v830 = vunpack.c.l.b16 %v516
    %v831 = vunpack.c.h.b16 %v516
    %v832 = vunpack.c.l.b16 %v517
    %v833 = vunpack.c.h.b16 %v517
    %v834 = vunpack.c.l.b16 %v518
    %v835 = vunpack.c.l.b16 %v519
    %v836 = vunpack.c.h.b16 %v519
    %v837 = vunpack.c.l.b16 %v520
    %v838 = vunpack.c.h.b16 %v520
    %v839 = vunpack.c.l.b16 %v521
    %v840 = vunpack.c.h.b16 %v521
    %v841 = vunpack.c.l.b16 %v522
    %v842 = vunpack.c.l.b16 %v523
    %v843 = vunpack.c.h.b16 %v523
    %v844 = vunpack.c.l.b16 %v524
    %v845 = vunpack.c.h.b16 %v524
    %v846 = vunpack.c.l.b16 %v525
    %v847 = vunpack.c.h.b16 %v525
    %v848 = vunpack.c.l.b16 %v526
    %v849 = vunpack.c.l.b16 %v527
    %v850 = vunpack.c.h.b16 %v527
    %v851 = vunpack.c.l.b16 %v528
    %v852 = vunpack.c.h.b16 %v528
    %v853 = vunpack.c.l.b16 %v529
    %v854 = vunpack.c.h.b16 %v529
    %v855 = vunpack.c.l.b16 %v530
    %v856 = vunpack.c.l.b16 %v531
    %v857 = vunpack.c.h.b16 %v531
    %v858 = vunpack.c.l.b16 %v532
    %v859 = vunpack.c.h.b16 %v532
    %v860 = vunpack.c.l.b16 %v533
    %v861 = vunpack.c.h.b16 %v533
    %v862 = vunpack.c.l.b16 %v534
    %v863 = vunpack.c.l.b16 %v535
    %v864 = vunpack.c.h.b16 %v535
    %v865 = vunpack.c.l.b16 %v536
    %v866 = vunpack.c.h.b16 %v536
    %v867 = vunpack.c.l.b16 %v537
    %v868 = vunpack.c.h.b16 %v537
    %v869 = vunpack.c.l.b16 %v538
    %v870 = vunpack.c.l.b16 %v539
    %v871 = vunpack.c.h.b16 %v539
    %v872 = vunpack.c.l.b16 %v540
    %v873 = vunpack.c.h.b16 %v540
    %v874 = vunpack.c.l.b16 %v541
    %v875 = vunpack.c.h.b16 %v541
    %v876 = vunpack.c.l.b16 %v542
    %v877 = vunpack.c.l.b16 %v543
    %v878 = vunpack.c.h.b16 %v543
    %v879 = vunpack.c.l.b16 %v544
    %v880 = vunpack.c.h.b16 %v544
    %v881 = vunpack.c.l.b16 %v545
    %v882 = vunpack.c.h.b16 %v545
    %v883 = vunpack.c.l.b16 %v546
    %v884 = vunpack.c.l.b16 %v547
    %v885 = vunpack.c.h.b16 %v547
    %v886 = vunpack.c.l.b16 %v548
    %v887 = vunpack.c.h.b16 %v548
    %v888 = vunpack.c.l.b16 %v549
    %v889 = vunpack.c.h.b16 %v549
    %v890 = vunpack.c.l.b16 %v550
    %v891 = vunpack.c.l.b16 %v551
    %v892 = vunpack.c.h.b16 %v551
    %v893 = vunpack.c.l.b16 %v552
    %v894 = vunpack.c.h.b16 %v552
    %v895 = vunpack.c.l.b16 %v553
    %v896 = vunpack.c.h.b16 %v553
    %v897 = vunpack.c.l.b16 %v554
    %v898 = vunpack.c.l.b16 %v555
    %v899 = vunpack.c.h.b16 %v555
    %v900 = vunpack.c.l.b16 %v556
    %v901 = vunpack.c.h.b16 %v556
    %v902 = vunpack.c.l.b16 %v557
    %v903 = vunpack.c.h.b16 %v557
    %v904 = vunpack.c.l.b16 %v558
    %v905 = vunpack.c.l.b16 %v559
    %v906 = vunpack.c.h.b16 %v559
    %v907 = vunpack.c.l.b16 %v560
    %v908 = vunpack.c.h.b16 %v560
    %v909 = vunpack.c.l.b16 %v561
    %v910 = vunpack.c.h.b16 %v561
    %v911 = vunpack.c.l.b16 %v562
    %v912 = vunpack.c.l.b16 %v563
    %v913 = vunpack.c.h.b16 %v563
    %v914 = vunpack.c.l.b16 %v564
    %v915 = vunpack.c.h.b16 %v564
    %v916 = vunpack.c.l.b16 %v565
    %v917 = vunpack.c.h.b16 %v565
    %v918 = vunpack.c.l.b16 %v566
    %v919 = vpack.c.b16 %v702, %v695
    %v920 = vpack.c.b16 %v703, %v696
    %v921 = vpack.c.b16 %v704, %v697
    %v922 = vpack.c.b16 %v705, %v698
    %v923 = vpack.c.b16 %v706, %v699
    %v924 = vpack.c.b16 %v707, %v700
    %v925 = vpack.c.b16 %v708, %v701
    %v926 = vpack.c.b16 %v716, %v709
    %v927 = vpack.c.b16 %v717, %v710
    %v928 = vpack.c.b16 %v718, %v711
    %v929 = vpack.c.b16 %v719, %v712
    %v930 = vpack.c.b16 %v720, %v713
    %v931 = vpack.c.b16 %v721, %v714
    %v932 = vpack.c.b16 %v722, %v715
    %v933 = vpack.c.b16 %v730, %v723
    %v934 = vpack.c.b16 %v731, %v724
    %v935 = vpack.c.b16 %v732, %v725
    %v936 = vpack.c.b16 %v733, %v726
    %v937 = vpack.c.b16 %v734, %v727
    %v938 = vpack.c.b16 %v735, %v728
    %v939 = vpack.c.b16 %v736, %v729
    %v940 = vpack.c.b16 %v744, %v737
    %v941 = vpack.c.b16 %v745, %v738
    %v942 = vpack.c.b16 %v746, %v739
    %v943 = vpack.c.b16 %v747, %v740
    %v944 = vpack.c.b16 %v748, %v741
    %v945 = vpack.c.b16 %v749, %v742
    %v946 = vpack.c.b16 %v750, %v743
    %v947 = vpack.c.b16 %v758, %v751
    %v948 = vpack.c.b16 %v759, %v752
    %v949 = vpack.c.b16 %v760, %v753
    %v950 = vpack.c.b16 %v761, %v754
    %v951 = vpack.c.b16 %v762, %v755
    %v952 = vpack.c.b16 %v763, %v756
    %v953 = vpack.c.b16 %v764, %v757
    %v954 = vpack.c.b16 %v772, %v765
    %v955 = vpack.c.b16 %v773, %v766
    %v956 = vpack.c.b16 %v774, %v767
    %v957 = vpack.c.b16 %v775, %v768
    %v958 = vpack.c.b16 %v776, %v769
    %v959 = vpack.c.b16 %v777, %v770
    %v960 = vpack.c.b16 %v778, %v771
    %v961 = vpack.c.b16 %v786, %v779
    %v962 = vpack.c.b16 %v787, %v780
    %v963 = vpack.c.b16 %v788, %v781
    %v964 = vpack.c.b16 %v789, %v782
    %v965 = vpack.c.b16 %v790, %v783
    %v966 = vpack.c.b16 %v791, %v784
    %v967 = vpack.c.b16 %v792, %v785
    %v968 = vpack.c.b16 %v800, %v793
    %v969 = vpack.c.b16 %v801, %v794
    %v970 = vpack.c.b16 %v802, %v795
    %v971 = vpack.c.b16 %v803, %v796
    %v972 = vpack.c.b16 %v804, %v797
    %v973 = vpack.c.b16 %v805, %v798
    %v974 = vpack.c.b16 %v806, %v799
    %v975 = vpack.c.b16 %v814, %v807
    %v976 = vpack.c.b16 %v815, %v808
    %v977 = vpack.c.b16 %v816, %v809
    %v978 = vpack.c.b16 %v817, %v810
    %v979 = vpack.c.b16 %v818, %v811
    %v980 = vpack.c.b16 %v819, %v812
    %v981 = vpack.c.b16 %v820, %v813
    %v982 = vpack.c.b16 %v828, %v821
    %v983 = vpack.c.b16 %v829, %v822
    %v984 = vpack.c.b16 %v830, %v823
    %v985 = vpack.c.b16 %v831, %v824
    %v986 = vpack.c.b16 %v832, %v825
    %v987 = vpack.c.b16 %v833, %v826
    %v988 = vpack.c.b16 %v834, %v827
    %v989 = vpack.c.b16 %v842, %v835
    %v990 = vpack.c.b16 %v843, %v836
    %v991 = vpack.c.b16 %v844, %v837
    %v992 = vpack.c.b16 %v845, %v838
    %v993 = vpack.c.b16 %v846, %v839
    %v994 = vpack.c.b16 %v847, %v840
    %v995 = vpack.c.b16 %v848, %v841
    %v996 = vpack.c.b16 %v856, %v849
    %v997 = vpack.c.b16 %v857, %v850
    %v998 = vpack.c.b16 %v858, %v851
    %v999 = vpack.c.b16 %v859, %v852
    %v1000 = vpack.c.b16 %v860, %v853
    %v1001 = vpack.c.b16 %v861, %v854
    %v1002 = vpack.c.b16 %v862, %v855
    %v1003 = vpack.c.b16 %v870, %v863
    %v1004 = vpack.c.b16 %v871, %v864
    %v1005 = vpack.c.b16 %v872, %v865
    %v1006 = vpack.c.b16 %v873, %v866
    %v1007 = vpack.c.b16 %v874, %v867
    %v1008 = vpack.c.b16 %v875, %v868
    %v1009 = vpack.c.b16 %v876, %v869
    %v1010 = vpack.c.b16 %v884, %v877
    %v1011 = vpack.c.b16 %v885, %v878
    %v1012 = vpack.c.b16 %v886, %v879
    %v1013 = vpack.c.b16 %v887, %v880
    %v1014 = vpack.c.b16 %v888, %v881
    %v1015 = vpack.c.b16 %v889, %v882
    %v1016 = vpack.c.b16 %v890, %v883
    %v1017 = vpack.c.b16 %v898, %v891
    %v1018 = vpack.c.b16 %v899, %v892
    %v1019 = vpack.c.b16 %v900, %v893
    %v1020 = vpack.c.b16 %v901, %v894
    %v1021 = vpack.c.b16 %v902, %v895
    %v1022 = vpack.c.b16 %v903, %v896
    %v1023 = vpack.c.b16 %v904, %v897
    %v1024 = vpack.c.b16 %v912, %v905
    %v1025 = vpack.c.b16 %v913, %v906
    %v1026 = vpack.c.b16 %v914, %v907
    %v1027 = vpack.c.b16 %v915, %v908
    %v1028 = vpack.c.b16 %v916, %v909
    %v1029 = vpack.c.b16 %v917, %v910
    %v1030 = vpack.c.b16 %v918, %v911
    %1143 = vmatpush.bf16.msra.mxu0 %v968
    %1144 = vmatpush.bf16.msra.mxu0 %v961
    %1145 = vmatpush.bf16.msra.mxu0 %v954
    %1146 = vmatpush.bf16.msra.mxu0 %v947
    %1147 = vmatpush.bf16.msra.mxu0 %v940
    %1148 = vmatpush.bf16.msra.mxu0 %v933
    %1149 = vmatpush.bf16.msra.mxu0 %v926
    %1150 = vmatpush.bf16.msra.mxu0 %v919
    %1151 = vmatmul.bf16.gmra.mxu0 %v437
    %v1152 = vpop.f32.mrf.mxu0
    %v1153 = vadd.f32 0.0, %v1152
    %v1154 = vpop.f32.mrf.mxu0
    %1155 = vdwg.mxu0
    %1156 = vmatpush.bf16.msra.mxu0 %v1024
    %1157 = vmatpush.bf16.msra.mxu0 %v1017
    %1158 = vmatpush.bf16.msra.mxu0 %v1010
    %1159 = vmatpush.bf16.msra.mxu0 %v1003
    %1160 = vmatpush.bf16.msra.mxu0 %v996
    %1161 = vmatpush.bf16.msra.mxu0 %v989
    %1162 = vmatpush.bf16.msra.mxu0 %v982
    %1163 = vmatpush.bf16.msra.mxu0 %v975
    %1164 = vmatmul.bf16.gmra.mxu0 %v438
    %v1165 = vpop.f32.mrf.mxu0
    %v1166 = vadd.f32 %v1153, %v1165
    %v1167 = vpop.f32.mrf.mxu0
    %1168 = vdwg.mxu0
    %1169 = vmatpush.bf16.msra.mxu0 %v969
    %1170 = vmatpush.bf16.msra.mxu0 %v962
    %1171 = vmatpush.bf16.msra.mxu0 %v955
    %1172 = vmatpush.bf16.msra.mxu0 %v948
    %1173 = vmatpush.bf16.msra.mxu0 %v941
    %1174 = vmatpush.bf16.msra.mxu0 %v934
    %1175 = vmatpush.bf16.msra.mxu0 %v927
    %1176 = vmatpush.bf16.msra.mxu0 %v920
    %1177 = vmatmul.bf16.gmra.mxu0 %v437
    %v1178 = vpop.f32.mrf.mxu0
    %v1179 = vadd.f32 0.0, %v1178
    %v1180 = vpop.f32.mrf.mxu0
    %1181 = vdwg.mxu0
    %1182 = vmatpush.bf16.msra.mxu0 %v1025
    %1183 = vmatpush.bf16.msra.mxu0 %v1018
    %1184 = vmatpush.bf16.msra.mxu0 %v1011
    %1185 = vmatpush.bf16.msra.mxu0 %v1004
    %1186 = vmatpush.bf16.msra.mxu0 %v997
    %1187 = vmatpush.bf16.msra.mxu0 %v990
    %1188 = vmatpush.bf16.msra.mxu0 %v983
    %1189 = vmatpush.bf16.msra.mxu0 %v976
    %1190 = vmatmul.bf16.gmra.mxu0 %v438
    %v1191 = vpop.f32.mrf.mxu0
    %v1192 = vadd.f32 %v1179, %v1191
    %v1193 = vpop.f32.mrf.mxu0
    %1194 = vdwg.mxu0
    %1195 = vmatpush.bf16.msra.mxu0 %v970
    %1196 = vmatpush.bf16.msra.mxu0 %v963
    %1197 = vmatpush.bf16.msra.mxu0 %v956
    %1198 = vmatpush.bf16.msra.mxu0 %v949
    %1199 = vmatpush.bf16.msra.mxu0 %v942
    %1200 = vmatpush.bf16.msra.mxu0 %v935
    %1201 = vmatpush.bf16.msra.mxu0 %v928
    %1202 = vmatpush.bf16.msra.mxu0 %v921
    %1203 = vmatmul.bf16.gmra.mxu0 %v437
    %v1204 = vpop.f32.mrf.mxu0
    %v1205 = vadd.f32 0.0, %v1204
    %v1206 = vpop.f32.mrf.mxu0
    %1207 = vdwg.mxu0
    %1208 = vmatpush.bf16.msra.mxu0 %v1026
    %1209 = vmatpush.bf16.msra.mxu0 %v1019
    %1210 = vmatpush.bf16.msra.mxu0 %v1012
    %1211 = vmatpush.bf16.msra.mxu0 %v1005
    %1212 = vmatpush.bf16.msra.mxu0 %v998
    %1213 = vmatpush.bf16.msra.mxu0 %v991
    %1214 = vmatpush.bf16.msra.mxu0 %v984
    %1215 = vmatpush.bf16.msra.mxu0 %v977
    %1216 = vmatmul.bf16.gmra.mxu0 %v438
    %v1217 = vpop.f32.mrf.mxu0
    %v1218 = vadd.f32 %v1205, %v1217
    %v1219 = vpop.f32.mrf.mxu0
    %1220 = vdwg.mxu0
    %1221 = vmatpush.bf16.msra.mxu0 %v971
    %1222 = vmatpush.bf16.msra.mxu0 %v964
    %1223 = vmatpush.bf16.msra.mxu0 %v957
    %1224 = vmatpush.bf16.msra.mxu0 %v950
    %1225 = vmatpush.bf16.msra.mxu0 %v943
    %1226 = vmatpush.bf16.msra.mxu0 %v936
    %1227 = vmatpush.bf16.msra.mxu0 %v929
    %1228 = vmatpush.bf16.msra.mxu0 %v922
    %1229 = vmatmul.bf16.gmra.mxu0 %v437
    %v1230 = vpop.f32.mrf.mxu0
    %v1231 = vadd.f32 0.0, %v1230
    %v1232 = vpop.f32.mrf.mxu0
    %1233 = vdwg.mxu0
    %1234 = vmatpush.bf16.msra.mxu0 %v1027
    %1235 = vmatpush.bf16.msra.mxu0 %v1020
    %1236 = vmatpush.bf16.msra.mxu0 %v1013
    %1237 = vmatpush.bf16.msra.mxu0 %v1006
    %1238 = vmatpush.bf16.msra.mxu0 %v999
    %1239 = vmatpush.bf16.msra.mxu0 %v992
    %1240 = vmatpush.bf16.msra.mxu0 %v985
    %1241 = vmatpush.bf16.msra.mxu0 %v978
    %1242 = vmatmul.bf16.gmra.mxu0 %v438
    %v1243 = vpop.f32.mrf.mxu0
    %v1244 = vadd.f32 %v1231, %v1243
    %v1245 = vpop.f32.mrf.mxu0
    %1246 = vdwg.mxu0
    %1247 = vmatpush.bf16.msra.mxu0 %v972
    %1248 = vmatpush.bf16.msra.mxu0 %v965
    %1249 = vmatpush.bf16.msra.mxu0 %v958
    %1250 = vmatpush.bf16.msra.mxu0 %v951
    %1251 = vmatpush.bf16.msra.mxu0 %v944
    %1252 = vmatpush.bf16.msra.mxu0 %v937
    %1253 = vmatpush.bf16.msra.mxu0 %v930
    %1254 = vmatpush.bf16.msra.mxu0 %v923
    %1255 = vmatmul.bf16.gmra.mxu0 %v437
    %v1256 = vpop.f32.mrf.mxu0
    %v1257 = vadd.f32 0.0, %v1256
    %v1258 = vpop.f32.mrf.mxu0
    %1259 = vdwg.mxu0
    %1260 = vmatpush.bf16.msra.mxu0 %v1028
    %1261 = vmatpush.bf16.msra.mxu0 %v1021
    %1262 = vmatpush.bf16.msra.mxu0 %v1014
    %1263 = vmatpush.bf16.msra.mxu0 %v1007
    %1264 = vmatpush.bf16.msra.mxu0 %v1000
    %1265 = vmatpush.bf16.msra.mxu0 %v993
    %1266 = vmatpush.bf16.msra.mxu0 %v986
    %1267 = vmatpush.bf16.msra.mxu0 %v979
    %1268 = vmatmul.bf16.gmra.mxu0 %v438
    %v1269 = vpop.f32.mrf.mxu0
    %v1270 = vadd.f32 %v1257, %v1269
    %v1271 = vpop.f32.mrf.mxu0
    %1272 = vdwg.mxu0
    %1273 = vmatpush.bf16.msra.mxu0 %v973
    %1274 = vmatpush.bf16.msra.mxu0 %v966
    %1275 = vmatpush.bf16.msra.mxu0 %v959
    %1276 = vmatpush.bf16.msra.mxu0 %v952
    %1277 = vmatpush.bf16.msra.mxu0 %v945
    %1278 = vmatpush.bf16.msra.mxu0 %v938
    %1279 = vmatpush.bf16.msra.mxu0 %v931
    %1280 = vmatpush.bf16.msra.mxu0 %v924
    %1281 = vmatmul.bf16.gmra.mxu0 %v437
    %v1282 = vpop.f32.mrf.mxu0
    %v1283 = vadd.f32 0.0, %v1282
    %v1284 = vpop.f32.mrf.mxu0
    %1285 = vdwg.mxu0
    %1286 = vmatpush.bf16.msra.mxu0 %v1029
    %1287 = vmatpush.bf16.msra.mxu0 %v1022
    %1288 = vmatpush.bf16.msra.mxu0 %v1015
    %1289 = vmatpush.bf16.msra.mxu0 %v1008
    %1290 = vmatpush.bf16.msra.mxu0 %v1001
    %1291 = vmatpush.bf16.msra.mxu0 %v994
    %1292 = vmatpush.bf16.msra.mxu0 %v987
    %1293 = vmatpush.bf16.msra.mxu0 %v980
    %1294 = vmatmul.bf16.gmra.mxu0 %v438
    %v1295 = vpop.f32.mrf.mxu0
    %v1296 = vadd.f32 %v1283, %v1295
    %v1297 = vpop.f32.mrf.mxu0
    %1298 = vdwg.mxu0
    %1299 = vmatpush.bf16.msra.mxu0 %v974
    %1300 = vmatpush.bf16.msra.mxu0 %v967
    %1301 = vmatpush.bf16.msra.mxu0 %v960
    %1302 = vmatpush.bf16.msra.mxu0 %v953
    %1303 = vmatpush.bf16.msra.mxu0 %v946
    %1304 = vmatpush.bf16.msra.mxu0 %v939
    %1305 = vmatpush.bf16.msra.mxu0 %v932
    %1306 = vmatpush.bf16.msra.mxu0 %v925
    %1307 = vmatmul.bf16.gmra.mxu0 %v437
    %v1308 = vpop.f32.mrf.mxu0
    %v1309 = vadd.f32 0.0, %v1308
    %v1310 = vpop.f32.mrf.mxu0
    %1311 = vdwg.mxu0
    %1312 = vmatpush.bf16.msra.mxu0 %v1030
    %1313 = vmatpush.bf16.msra.mxu0 %v1023
    %1314 = vmatpush.bf16.msra.mxu0 %v1016
    %1315 = vmatpush.bf16.msra.mxu0 %v1009
    %1316 = vmatpush.bf16.msra.mxu0 %v1002
    %1317 = vmatpush.bf16.msra.mxu0 %v995
    %1318 = vmatpush.bf16.msra.mxu0 %v988
    %1319 = vmatpush.bf16.msra.mxu0 %v981
    %1320 = vmatmul.bf16.gmra.mxu0 %v438
    %v1321 = vpop.f32.mrf.mxu0
    %v1322 = vadd.f32 %v1309, %v1321
    %v1323 = vpop.f32.mrf.mxu0
    %1324 = vdwg.mxu0
    %1325 = vst [vmem:[%s4] sm:$0xff] %v1166
    %1326 = vst [vmem:[%s4 + $0x8] sm:$0xff] %v1192
    %1327 = vst [vmem:[%s4 + $0x10] sm:$0xff] %v1218
    %1328 = vst [vmem:[%s4 + $0x18] sm:$0xff] %v1244
    %1329 = vst [vmem:[%s4 + $0x20] sm:$0xff] %v1270
    %1330 = vst [vmem:[%s4 + $0x28] sm:$0xff] %v1296
    %1331 = vst [vmem:[%s4 + $0x30] sm:$0xff] %v1322
    // Predicated region
    $region30: #{p_obs_logits_pallas.1} parent=1 // pred_check
      _
    $region31: #{p_obs_logits_pallas.1} parent=1 // pred_check_branch
      %1333 = sbr.rel (0) target = $region33
    $region32: #{p_obs_logits_pallas.1} parent=1 // pred_region
      _
    $region33: #{p_obs_logits_pallas.1} parent=1 // pred_fallthru
      _
    // Predicated region
    $region34: #{p_obs_logits_pallas.1} parent=1 // pred_check
      _
    $region35: #{p_obs_logits_pallas.1} parent=1 // pred_check_branch
      %1335 = sbr.rel (0) target = $region37
    $region36: #{p_obs_logits_pallas.1} parent=1 // pred_region
      _
    $region37: #{p_obs_logits_pallas.1} parent=1 // pred_fallthru
      _
    %1336 = vsyncpa [#allocation3], 1
    %1337 = vsyncpa [#allocation5], 1

</llo_original>
